<compile_context>
chip_gen: v6e
topology: v6e:2x2x1
jax: 0.10.0
libtpu: 0.0.40
codegen_flags: <defaults>
</compile_context>

<pallas_src>
import jax
import jax.numpy as jnp
from jax import lax
from jax.experimental import pallas as pl
from jax.experimental.pallas import tpu as pltpu


def _make_reg_l1_kernel(HW, K, C):
    def kernel(feat_ref, ind_ref, mask_ref, target_ref, out_ref):
        # feat_ref:   (C, HW)  f32   per-batch NCHW slab, HW on the lane axis
        # ind_ref:    (1, K)   i32   gather indices, K on the lane axis
        # mask_ref:   (1, K)   f32   0/1 mask, K on the lane axis
        # target_ref: (C, K)   f32   targets, K on the lane axis
        # out_ref:    (1,1,1)  f32   per-batch partial numerator
        ind_vec = ind_ref[...]                                   # (1, K)
        hw_iota = lax.broadcasted_iota(jnp.int32, (HW, K), 0)    # (HW, K)
        onehot = (hw_iota == ind_vec).astype(jnp.float32)        # (HW, K), exact 0/1

        # In-VMEM gather on the MXU: (C, HW) @ (HW, K) -> (C, K). Exact because
        # every output element is one feature value times 1.0 plus zeros.
        pred = jnp.dot(feat_ref[...], onehot,
                       preferred_element_type=jnp.float32)       # (C, K)

        t = target_ref[...]                                      # (C, K)
        m = mask_ref[...]                                        # (1, K) -> broadcast over C
        # |pred*m - t*m| == |pred - t| * m  since m >= 0.
        partial = jnp.sum(jnp.abs(pred - t) * m)
        out_ref[...] = partial.reshape(1, 1, 1)

    return kernel


def reg_l1_loss(output, mask, ind, target):
    """output: (B, C, H, W) f32; mask: (B, K); ind: (B, K) int; target: (B, K, C).
    Returns scalar f32 loss (matches PyTorch RegL1Loss.forward)."""
    B, C, H, W = output.shape
    K = ind.shape[1]
    HW = H * W

    # Free view of the NCHW feature map: no transpose, no extra HBM pass.
    feat = output.reshape(B, C, HW).astype(jnp.float32)          # (B, C, HW)

    ind_i = ind.astype(jnp.int32).reshape(B, 1, K)               # (B, 1, K)
    mask_f = mask.astype(jnp.float32)                            # (B, K)
    mask3 = mask_f.reshape(B, 1, K)                              # (B, 1, K)
    # Tiny (B*K*C) transpose so the per-batch target tile is lane-dense (C, K).
    target_ck = jnp.transpose(target.astype(jnp.float32), (0, 2, 1))  # (B, C, K)

    partials = pl.pallas_call(
        _make_reg_l1_kernel(HW, K, C),
        out_shape=jax.ShapeDtypeStruct((B, 1, 1), jnp.float32),
        grid=(B,),
        in_specs=[
            pl.BlockSpec((pl.Squeezed(), C, HW), lambda b: (b, 0, 0)),  # feat slab
            pl.BlockSpec((pl.Squeezed(), 1, K), lambda b: (b, 0, 0)),   # ind
            pl.BlockSpec((pl.Squeezed(), 1, K), lambda b: (b, 0, 0)),   # mask
            pl.BlockSpec((pl.Squeezed(), C, K), lambda b: (b, 0, 0)),   # target (C,K)
        ],
        out_specs=pl.BlockSpec((1, 1, 1), lambda b: (b, 0, 0)),
        compiler_params=pltpu.CompilerParams(
            dimension_semantics=("parallel",)),                  # batch splits across TCs
    )(feat, ind_i, mask3, target_ck)

    # Denominator: sum of the (B, K, C)-expanded mask == C * sum(mask).
    denom = jnp.sum(mask_f) * jnp.float32(C) + jnp.float32(1e-4)
    return jnp.sum(partials) / denom


def _reference(output, mask, ind, target):
    B, C, H, W = output.shape
    feat = jnp.transpose(output, (0, 2, 3, 1)).reshape(B, H * W, C)
    pred = jnp.take_along_axis(feat, ind[:, :, None].astype(jnp.int32), axis=1)
    m = jnp.broadcast_to(mask[:, :, None].astype(jnp.float32), pred.shape)
    loss = jnp.sum(jnp.abs(pred * m - target * m))
    return loss / (jnp.sum(m) + 0.0001)


if __name__ == "__main__":
    key = jax.random.PRNGKey(0)
    k1, k2, k3, k4 = jax.random.split(key, 4)

    B, C, H, W, K = 2, 4, 16, 16, 8
    output = jax.random.normal(k1, (B, C, H, W), dtype=jnp.float32)
    ind = jax.random.randint(k2, (B, K), 0, H * W, dtype=jnp.int32)
    mask = (jax.random.uniform(k3, (B, K)) > 0.3).astype(jnp.float32)
    target = jax.random.normal(k4, (B, K, C), dtype=jnp.float32)

    loss = jax.block_until_ready(reg_l1_loss(output, mask, ind, target))
    ref = jax.block_until_ready(_reference(output, mask, ind, target))
    assert jnp.allclose(loss, ref, atol=1e-5, rtol=1e-5), (loss, ref)
    print("KERNEL_OK")
</pallas_src>

<mosaic_0001>
module attributes {stable_mosaic.version = 11 : i64} {
  func.func @kernel(%arg0: i32, %arg1: memref<1x4x256xf32, #tpu.memory_space<vmem>>, %arg2: memref<1x1x8xi32, #tpu.memory_space<vmem>>, %arg3: memref<1x1x8xf32, #tpu.memory_space<vmem>>, %arg4: memref<1x4x8xf32, #tpu.memory_space<vmem>>, %arg5: memref<1x1x1xf32, #tpu.memory_space<vmem>>) attributes {dimension_semantics = [#tpu.dimension_semantics<parallel>], iteration_bounds = array<i64: 2>, scalar_prefetch = 0 : i64, scratch_operands = 0 : i64, tpu.core_type = #tpu.core_type<tc>, window_params = [{transform_indices = @transform_0, window_bounds = array<i64: 1, 4, 256>}, {transform_indices = @transform_1, window_bounds = array<i64: 1, 1, 8>}, {transform_indices = @transform_2, window_bounds = array<i64: 1, 1, 8>}, {transform_indices = @transform_3, window_bounds = array<i64: 1, 4, 8>}, {transform_indices = @transform_4, window_bounds = array<i64: 1, 1, 1>}]} {
    %c0 = arith.constant 0 : index
    %c0_0 = arith.constant 0 : index
    %c0_1 = arith.constant 0 : index
    %0 = vector.load %arg2[%c0, %c0_0, %c0_1] : memref<1x1x8xi32, #tpu.memory_space<vmem>>, vector<1x1x8xi32>
    %1 = vector.shape_cast %0 : vector<1x1x8xi32> to vector<1x8xi32>
    %2 = tpu.iota {dimensions = array<i32: 0>} : vector<256x8xi32>
    %3 = vector.broadcast %1 : vector<1x8xi32> to vector<256x8xi32>
    %4 = arith.cmpi eq, %2, %3 : vector<256x8xi32>
    %5 = arith.extui %4 : vector<256x8xi1> to vector<256x8xi32>
    %6 = arith.sitofp %5 : vector<256x8xi32> to vector<256x8xf32>
    %c0_2 = arith.constant 0 : index
    %c0_3 = arith.constant 0 : index
    %c0_4 = arith.constant 0 : index
    %7 = vector.load %arg1[%c0_2, %c0_3, %c0_4] : memref<1x4x256xf32, #tpu.memory_space<vmem>>, vector<1x4x256xf32>
    %8 = vector.shape_cast %7 : vector<1x4x256xf32> to vector<4x256xf32>
    %cst = arith.constant dense<0.000000e+00> : vector<4x8xf32>
    %9 = tpu.matmul %8, %6, %cst {dimension_numbers = #tpu.dot_dimension_numbers<[1], [0], [0], [1], [0, 0, 1, 1], [], []>} : vector<4x256xf32>, vector<256x8xf32>, vector<4x8xf32> -> vector<4x8xf32>
    %c0_5 = arith.constant 0 : index
    %c0_6 = arith.constant 0 : index
    %c0_7 = arith.constant 0 : index
    %10 = vector.load %arg4[%c0_5, %c0_6, %c0_7] : memref<1x4x8xf32, #tpu.memory_space<vmem>>, vector<1x4x8xf32>
    %11 = vector.shape_cast %10 : vector<1x4x8xf32> to vector<4x8xf32>
    %c0_8 = arith.constant 0 : index
    %c0_9 = arith.constant 0 : index
    %c0_10 = arith.constant 0 : index
    %12 = vector.load %arg3[%c0_8, %c0_9, %c0_10] : memref<1x1x8xf32, #tpu.memory_space<vmem>>, vector<1x1x8xf32>
    %13 = vector.shape_cast %12 : vector<1x1x8xf32> to vector<1x8xf32>
    %14 = arith.subf %9, %11 : vector<4x8xf32>
    %15 = math.absf %14 : vector<4x8xf32>
    %16 = vector.broadcast %13 : vector<1x8xf32> to vector<4x8xf32>
    %17 = arith.mulf %15, %16 : vector<4x8xf32>
    %18 = vector.shape_cast %17 : vector<4x8xf32> to vector<1x4x8xf32>
    %cst_11 = arith.constant dense<0.000000e+00> : vector<1xf32>
    %19 = vector.multi_reduction <add>, %18, %cst_11 [1, 2] : vector<1x4x8xf32> to vector<1xf32>
    %20 = vector.shape_cast %19 : vector<1xf32> to vector<1x1x1xf32>
    %21 = vector.extract %20[0, 0, 0] : f32 from vector<1x1x1xf32>
    %22 = vector.broadcast %21 : f32 to vector<1x1x1xf32>
    %c0_12 = arith.constant 0 : index
    %c0_13 = arith.constant 0 : index
    %c0_14 = arith.constant 0 : index
    %23 = vector.load %arg5[%c0_12, %c0_13, %c0_14] : memref<1x1x1xf32, #tpu.memory_space<vmem>>, vector<1x1x1xf32>
    tpu.vector_store %arg5[%c0_12, %c0_13, %c0_14], %22 {strides = array<i32>} : memref<1x1x1xf32, #tpu.memory_space<vmem>>, vector<1x1x1xf32>,
    return
  }
  func.func @transform_0(%arg0: i32) -> (i32, i32, i32) {
    %c0_i32 = arith.constant 0 : i32
    %c0_i32_0 = arith.constant 0 : i32
    %c0_i32_1 = arith.constant 0 : i32
    return %arg0, %c0_i32, %c0_i32_0 : i32, i32, i32
  }
  func.func @transform_1(%arg0: i32) -> (i32, i32, i32) {
    %c0_i32 = arith.constant 0 : i32
    %c0_i32_0 = arith.constant 0 : i32
    %c0_i32_1 = arith.constant 0 : i32
    return %arg0, %c0_i32, %c0_i32_0 : i32, i32, i32
  }
  func.func @transform_2(%arg0: i32) -> (i32, i32, i32) {
    %c0_i32 = arith.constant 0 : i32
    %c0_i32_0 = arith.constant 0 : i32
    %c0_i32_1 = arith.constant 0 : i32
    return %arg0, %c0_i32, %c0_i32_0 : i32, i32, i32
  }
  func.func @transform_3(%arg0: i32) -> (i32, i32, i32) {
    %c0_i32 = arith.constant 0 : i32
    %c0_i32_0 = arith.constant 0 : i32
    %c0_i32_1 = arith.constant 0 : i32
    return %arg0, %c0_i32, %c0_i32_0 : i32, i32, i32
  }
  func.func @transform_4(%arg0: i32) -> (i32, i32, i32) {
    %c0_i32 = arith.constant 0 : i32
    %c0_i32_0 = arith.constant 0 : i32
    %c0_i32_1 = arith.constant 0 : i32
    return %arg0, %c0_i32, %c0_i32_0 : i32, i32, i32
  }
}

</mosaic_0001>

<llo_original>
// kernel: tpu_custom_call.1
$region0: #{tpu_custom_call.1}
  #allocation0 [shape = 'u32[]', space=smem, size = 0x4, offset = 0x4, fixed_abs, tag = 'smem constant byte address 0x4 - core index']
  #allocation1 [shape = 'u32[144,128]{1,0:T(1,128)}', space=vmem, size = 0x12000, scoped, tag = 'internal scratch']
  %s0 = inlined_call_operand.hbm [shape: f32[2,4,256], index: 0, kind: input, shape index: {}]
  %s1 = inlined_call_operand.hbm [shape: s32[2,1,8], index: 1, kind: input, shape index: {}]
  %s2 = inlined_call_operand.vmem [shape: f32[2,1,8], index: 2, kind: input, shape index: {}]
  %s3 = inlined_call_operand.hbm [shape: f32[2,4,8], index: 3, kind: input, shape index: {}]
  %s4 = inlined_call_operand.vmem [shape: f32[2,1,1], index: 4, kind: output, shape index: {}]
  %s5 = sld [smem:[#allocation0]]
  $region61: #{tpu_custom_call.1} parent=0
    _
  %s7 = ssub.s32 1, %s5
  %s8 = scalar_select 0, %s7, %s5
  $region1: #{tpu_custom_call.1} parent=0
    #allocation2 [shape = 'u8[8192]{0}', space=vmem, size = 0x2000, scoped, tag = 'input window, operand 0']
    #allocation3 [shape = 's32[2]{0}', space=sflag, size = 0x8, scoped, tag = 'scoped memory for tpu_custom_call.1']
    #allocation4 [shape = 'u8[1024]{0}', space=vmem, size = 0x400, scoped, tag = 'input window, operand 1']
    #allocation5 [shape = 's32[2]{0}', space=sflag, size = 0x8, scoped, tag = 'scoped memory for tpu_custom_call.1']
    #allocation6 [shape = 'u8[4096]{0}', space=vmem, size = 0x1000, scoped, tag = 'input window, operand 3']
    %9 = vsyncpa [#allocation3], 0
    %s10 = scalar_lea.sflag [#allocation3], 1
    %11 = vsyncpa %s10, 0
    %12 = vsyncpa [#allocation5], 0
    %s13 = scalar_lea.sflag [#allocation5], 1
    %14 = vsyncpa %s13, 0
    loop: start=0, step=1, limit=4
    $region2: #{tpu_custom_call.1} parent=1 // loop_pre_header
      _
    $region3: #{tpu_custom_call.1} parent=1 // loop_header
      %s16 = sphi 0, %s20
      %p17 = scmp.ge.s32.totalorder %s16, 4
      %s26 = sphi 0, %s28
      %s29 = sphi 0, %s26
      %s30 = sphi 0, %s29
      %s46 = sphi 0, %s30
      %s52 = sphi 0, %s54
      %s55 = sphi 0, %s52
      %s56 = sphi 0, %s55
      %s72 = sphi 0, %s56
      %s78 = sphi 0, %s80
      %s81 = sphi 0, %s78
      %s82 = sphi 0, %s81
      %s98 = sphi 0, %s82
      %s104 = sphi 0, %s106
      %s107 = sphi 0, %s104
      %s108 = sphi 0, %s107
      %s124 = sphi 0, %s108
      %s130 = sphi 0, %s132
      %s133 = sphi 0, %s130
      %s134 = sphi 0, %s133
      %s150 = sphi 0, %s134
    $region4: #{tpu_custom_call.1} parent=1 // loop_header_branch
      %19 = sbr.rel (%p17) target = $region8
    $region5: #{tpu_custom_call.1} parent=1 // loop_body
      %s21 = ssub.s32 %s16, 1
      %s22 = ssub.s32 %s16, 2
      %s23 = sadd.s32 %s16, 1
      %s24 = ssub.s32 %s16, %s23
      %p25 = scmp.eq.s32.totalorder %s24, 0
      %s27 = sadd.s32 %s26, 1
      %s28 = scalar_select %p25, %s26, %s27
      %p31 = pneg %p25
      %p32 = scmp.eq.s32.totalorder %s16, 1
      %p33 = por %p31, %p32
      %p34 = scmp.ne.s32.totalorder %s26, %s29
      %p35 = scmp.eq.s32.totalorder %s16, 0
      %p36 = por %p34, %p35
      %p37 = scmp.ne.s32.totalorder %s26, %s29
      %p38 = scmp.eq.s32.totalorder %s21, 1
      %p39 = por %p37, %p38
      %p40 = scmp.ne.s32.totalorder %s29, %s30
      %p41 = scmp.eq.s32.totalorder %s21, 0
      %p42 = por %p40, %p41
      %p43 = scmp.ne.s32.totalorder %s29, %s30
      %p44 = scmp.eq.s32.totalorder %s22, 1
      %p45 = por %p43, %p44
      %p47 = scmp.ne.s32.totalorder %s30, %s46
      %p48 = scmp.eq.s32.totalorder %s22, 0
      %p49 = por %p47, %p48
      %s50 = ssub.s32 %s16, %s23
      %p51 = scmp.eq.s32.totalorder %s50, 0
      %s53 = sadd.s32 %s52, 1
      %s54 = scalar_select %p51, %s52, %s53
      %p57 = pneg %p51
      %p58 = scmp.eq.s32.totalorder %s16, 1
      %p59 = por %p57, %p58
      %p60 = scmp.ne.s32.totalorder %s52, %s55
      %p61 = scmp.eq.s32.totalorder %s16, 0
      %p62 = por %p60, %p61
      %p63 = scmp.ne.s32.totalorder %s52, %s55
      %p64 = scmp.eq.s32.totalorder %s21, 1
      %p65 = por %p63, %p64
      %p66 = scmp.ne.s32.totalorder %s55, %s56
      %p67 = scmp.eq.s32.totalorder %s21, 0
      %p68 = por %p66, %p67
      %p69 = scmp.ne.s32.totalorder %s55, %s56
      %p70 = scmp.eq.s32.totalorder %s22, 1
      %p71 = por %p69, %p70
      %p73 = scmp.ne.s32.totalorder %s56, %s72
      %p74 = scmp.eq.s32.totalorder %s22, 0
      %p75 = por %p73, %p74
      %s76 = ssub.s32 %s16, %s23
      %p77 = scmp.eq.s32.totalorder %s76, 0
      %s79 = sadd.s32 %s78, 1
      %s80 = scalar_select %p77, %s78, %s79
      %p83 = pneg %p77
      %p84 = scmp.eq.s32.totalorder %s16, 1
      %p85 = por %p83, %p84
      %p86 = scmp.ne.s32.totalorder %s78, %s81
      %p87 = scmp.eq.s32.totalorder %s16, 0
      %p88 = por %p86, %p87
      %p89 = scmp.ne.s32.totalorder %s78, %s81
      %p90 = scmp.eq.s32.totalorder %s21, 1
      %p91 = por %p89, %p90
      %p92 = scmp.ne.s32.totalorder %s81, %s82
      %p93 = scmp.eq.s32.totalorder %s21, 0
      %p94 = por %p92, %p93
      %p95 = scmp.ne.s32.totalorder %s81, %s82
      %p96 = scmp.eq.s32.totalorder %s22, 1
      %p97 = por %p95, %p96
      %p99 = scmp.ne.s32.totalorder %s82, %s98
      %p100 = scmp.eq.s32.totalorder %s22, 0
      %p101 = por %p99, %p100
      %s102 = ssub.s32 %s16, %s23
      %p103 = scmp.eq.s32.totalorder %s102, 0
      %s105 = sadd.s32 %s104, 1
      %s106 = scalar_select %p103, %s104, %s105
      %p109 = pneg %p103
      %p110 = scmp.eq.s32.totalorder %s16, 1
      %p111 = por %p109, %p110
      %p112 = scmp.ne.s32.totalorder %s104, %s107
      %p113 = scmp.eq.s32.totalorder %s16, 0
      %p114 = por %p112, %p113
      %p115 = scmp.ne.s32.totalorder %s104, %s107
      %p116 = scmp.eq.s32.totalorder %s21, 1
      %p117 = por %p115, %p116
      %p118 = scmp.ne.s32.totalorder %s107, %s108
      %p119 = scmp.eq.s32.totalorder %s21, 0
      %p120 = por %p118, %p119
      %p121 = scmp.ne.s32.totalorder %s107, %s108
      %p122 = scmp.eq.s32.totalorder %s22, 1
      %p123 = por %p121, %p122
      %p125 = scmp.ne.s32.totalorder %s108, %s124
      %p126 = scmp.eq.s32.totalorder %s22, 0
      %p127 = por %p125, %p126
      %s128 = ssub.s32 %s16, %s23
      %p129 = scmp.eq.s32.totalorder %s128, 0
      %s131 = sadd.s32 %s130, 1
      %s132 = scalar_select %p129, %s130, %s131
      %p135 = pneg %p129
      %p136 = scmp.eq.s32.totalorder %s16, 1
      %p137 = por %p135, %p136
      %p138 = scmp.ne.s32.totalorder %s130, %s133
      %p139 = scmp.eq.s32.totalorder %s16, 0
      %p140 = por %p138, %p139
      %p141 = scmp.ne.s32.totalorder %s130, %s133
      %p142 = scmp.eq.s32.totalorder %s21, 1
      %p143 = por %p141, %p142
      %p144 = scmp.ne.s32.totalorder %s133, %s134
      %p145 = scmp.eq.s32.totalorder %s21, 0
      %p146 = por %p144, %p145
      %p147 = scmp.ne.s32.totalorder %s133, %s134
      %p148 = scmp.eq.s32.totalorder %s22, 1
      %p149 = por %p147, %p148
      %p151 = scmp.ne.s32.totalorder %s134, %s150
      %p152 = scmp.eq.s32.totalorder %s22, 0
      %p153 = por %p151, %p152
      %p154 = scmp.le.s32.totalorder 1, %s16
      %p155 = scmp.lt.s32.totalorder %s16, 3
      %p156 = pnand %p154, %p155
      %p157 = pneg %p156
      // Predicated region
      $region9: #{tpu_custom_call.1} parent=5 // pred_check
        _
      $region10: #{tpu_custom_call.1} parent=5 // pred_check_branch
        %159 = sbr.rel (%p156) target = $region12
      $region11: #{tpu_custom_call.1} parent=5 // pred_region
        %s160 = ssub.s32 %s16, 1
      $region12: #{tpu_custom_call.1} parent=5 // pred_fallthru
        _
      %p161 = scmp.lt.s32.totalorder %s16, 2
      // Predicated region
      $region13: #{tpu_custom_call.1} parent=5 // pred_check
        %p162 = pneg %p161
      $region14: #{tpu_custom_call.1} parent=5 // pred_check_branch
        %164 = sbr.rel (%p162) target = $region16
      $region15: #{tpu_custom_call.1} parent=5 // pred_region
        // Predicated region
        $region17: #{tpu_custom_call.1} parent=15 // pred_check
          %p165 = pneg %p36
        $region18: #{tpu_custom_call.1} parent=15 // pred_check_branch
          %167 = sbr.rel (%p165) target = $region20
        $region19: #{tpu_custom_call.1} parent=15 // pred_region
          %s168 = sand.u32 %s26, 1
          %s169 = scalar_lea.sflag [#allocation3], %s168
          %s170 = sand.u32 %s26, 1
          %s171 = smul.addr %s170, 8
          %s172 = scalar_lea.vmem [#allocation2], %s171
          %s174 = ssub.s32 128, 128
          %175 = vsyncadd %s169, %s174
          %s176 = smul.addr %s16, 2
          %s177 = smul.addr %s176, 64
          %s178 = scalar_lea.hbm %s0, %s177
          %s180 = sshll.u32 %s172, 4
          %s181 = int_to_ptr.vmem [resolvable:$true] %s180
          %183 = dma.hbm_to_vmem [thread:$0]  %s178, 128, %s181, %s169
        $region20: #{tpu_custom_call.1} parent=15 // pred_fallthru
          _
        // Predicated region
        $region21: #{tpu_custom_call.1} parent=15 // pred_check
          %p184 = pneg %p62
        $region22: #{tpu_custom_call.1} parent=15 // pred_check_branch
          %186 = sbr.rel (%p184) target = $region24
        $region23: #{tpu_custom_call.1} parent=15 // pred_region
          %s187 = sand.u32 %s16, 1
          %s188 = scalar_lea.sflag [#allocation5], %s187
          %s189 = sand.u32 %s52, 1
          %s190 = scalar_lea.vmem [#allocation4], %s189
          %s192 = ssub.s32 16, 16
          %193 = vsyncadd %s188, %s192
          %s194 = smul.addr %s16, 16
          %s195 = scalar_lea.hbm %s1, %s194
          %s197 = sshll.u32 %s190, 4
          %s198 = int_to_ptr.vmem [resolvable:$true] %s197
          %200 = dma.hbm_to_vmem [thread:$0]  %s195, 16, %s198, %s188
        $region24: #{tpu_custom_call.1} parent=15 // pred_fallthru
          _
        // Predicated region
        $region25: #{tpu_custom_call.1} parent=15 // pred_check
          %p201 = pneg %p88
        $region26: #{tpu_custom_call.1} parent=15 // pred_check_branch
          %203 = sbr.rel (%p201) target = $region28
        $region27: #{tpu_custom_call.1} parent=15 // pred_region
          %p204 = scmp.lt.s32.totalorder %s16, 1
          %s205 = scalar_select %p204, %s16, 1
          %s206 = scalar_lea.vmem %s2, %s205
        $region28: #{tpu_custom_call.1} parent=15 // pred_fallthru
          _
        // Predicated region
        $region29: #{tpu_custom_call.1} parent=15 // pred_check
          %p207 = pneg %p114
        $region30: #{tpu_custom_call.1} parent=15 // pred_check_branch
          %209 = sbr.rel (%p207) target = $region32
        $region31: #{tpu_custom_call.1} parent=15 // pred_region
          %s210 = sand.u32 %s16, 1
          %s211 = scalar_lea.sflag [#allocation5], %s210
          %s212 = sand.u32 %s104, 1
          %s213 = smul.addr %s212, 4
          %s214 = scalar_lea.vmem [#allocation6], %s213
          %s216 = ssub.s32 64, 64
          %217 = vsyncadd %s211, %s216
          %s218 = smul.addr %s16, 64
          %s219 = scalar_lea.hbm %s3, %s218
          %s221 = sshll.u32 %s214, 4
          %s222 = int_to_ptr.vmem [resolvable:$true] %s221
          %224 = dma.hbm_to_vmem [thread:$0]  %s219, 64, %s222, %s211
        $region32: #{tpu_custom_call.1} parent=15 // pred_fallthru
          _
      $region16: #{tpu_custom_call.1} parent=5 // pred_fallthru
        _
      %p225 = scmp.le.s32.totalorder 1, %s16
      %p226 = scmp.lt.s32.totalorder %s16, 3
      %p227 = pnand %p225, %p226
      %p228 = pneg %p227
      // Predicated region
      $region33: #{tpu_custom_call.1} parent=5 // pred_check
        _
      $region34: #{tpu_custom_call.1} parent=5 // pred_check_branch
        %230 = sbr.rel (%p227) target = $region36
      $region35: #{tpu_custom_call.1} parent=5 // pred_region
        %s231 = ssub.s32 %s16, 1
        %s232 = sand.u32 %s29, 1
        %s233 = scalar_lea.sflag [#allocation3], %s232
        %s234 = sand.u32 %s29, 1
        %s235 = smul.addr %s234, 8
        %s236 = scalar_lea.vmem [#allocation2], %s235
        // Predicated region
        $region37: #{tpu_custom_call.1} parent=35 // pred_check
          %p237 = pneg %p42
        $region38: #{tpu_custom_call.1} parent=35 // pred_check_branch
          %239 = sbr.rel (%p237) target = $region40
        $region39: #{tpu_custom_call.1} parent=35 // pred_region
          %240 = dma.done %s233, 128
        $region40: #{tpu_custom_call.1} parent=35 // pred_fallthru
          _
        %s241 = sand.u32 %s21, 1
        %s242 = scalar_lea.sflag [#allocation5], %s241
        %s243 = sand.u32 %s55, 1
        %s244 = scalar_lea.vmem [#allocation4], %s243
        // Predicated region
        $region41: #{tpu_custom_call.1} parent=35 // pred_check
          %p245 = pneg %p68
        $region42: #{tpu_custom_call.1} parent=35 // pred_check_branch
          %247 = sbr.rel (%p245) target = $region44
        $region43: #{tpu_custom_call.1} parent=35 // pred_region
          %248 = dma.done %s242, 16
        $region44: #{tpu_custom_call.1} parent=35 // pred_fallthru
          _
        %s249 = sand.u32 %s21, 1
        %s250 = scalar_lea.sflag [#allocation5], %s249
        %s251 = sand.u32 %s107, 1
        %s252 = smul.addr %s251, 4
        %s253 = scalar_lea.vmem [#allocation6], %s252
        // Predicated region
        $region45: #{tpu_custom_call.1} parent=35 // pred_check
          %p254 = pneg %p120
        $region46: #{tpu_custom_call.1} parent=35 // pred_check_branch
          %256 = sbr.rel (%p254) target = $region48
        $region47: #{tpu_custom_call.1} parent=35 // pred_region
          %257 = dma.done %s250, 64
        $region48: #{tpu_custom_call.1} parent=35 // pred_fallthru
          _
        %s258 = sand.u32 %s29, 1
        %s259 = scalar_lea.sflag [#allocation3], %s258
        %s260 = sand.u32 %s29, 1
        %s261 = smul.addr %s260, 8
        %s262 = scalar_lea.vmem [#allocation2], %s261
        %p263 = pneg %p42
        %p264 = pneg %p39
        %s265 = sand.u32 %s21, 1
        %s266 = scalar_lea.sflag [#allocation5], %s265
        %s267 = sand.u32 %s55, 1
        %s268 = scalar_lea.vmem [#allocation4], %s267
        %p269 = pneg %p68
        %p270 = pneg %p65
        %p271 = scmp.lt.s32.totalorder %s21, 1
        %s272 = scalar_select %p271, %s21, 1
        %s273 = scalar_lea.vmem %s2, %s272
        %p274 = pneg %p94
        %p275 = pneg %p91
        %s276 = sand.u32 %s21, 1
        %s277 = scalar_lea.sflag [#allocation5], %s276
        %s278 = sand.u32 %s107, 1
        %s279 = smul.addr %s278, 4
        %s280 = scalar_lea.vmem [#allocation6], %s279
        %p281 = pneg %p120
        %p282 = pneg %p117
        %p283 = pneg %p146
        %p284 = pneg %p143
        %p285 = scmp.lt.s32.totalorder %s21, 1
        %s286 = scalar_select %p285, %s21, 1
        %s287 = scalar_lea.vmem %s4, %s286
        %p288 = scmp.lt.s32.totalorder %s21, 1
        %s289 = scalar_select %p288, %s21, 1
        %s290 = scalar_lea.vmem %s2, %s289
        %p291 = scmp.lt.s32.totalorder %s21, 1
        %s292 = scalar_select %p291, %s21, 1
        %s293 = scalar_lea.vmem %s4, %s292
        %v294 = vld [vmem:[%s244] sm:$0x1]
        %v295 = vlaneseq
        %v296 = vshrl.u32 %v295, 7
        %v297 = vadd.s32 %v296, 8
        %v298 = vadd.s32 %v296, 16
        %v299 = vadd.s32 %v296, 24
        %v300 = vadd.s32 %v296, 32
        %v301 = vadd.s32 %v296, 40
        %v302 = vadd.s32 %v296, 48
        %v303 = vadd.s32 %v296, 56
        %v304 = vadd.s32 %v296, 64
        %v305 = vadd.s32 %v296, 72
        %v306 = vadd.s32 %v296, 80
        %v307 = vadd.s32 %v296, 88
        %v308 = vadd.s32 %v296, 96
        %v309 = vadd.s32 %v296, 104
        %v310 = vadd.s32 %v296, 112
        %v311 = vadd.s32 %v296, 120
        %v312 = vadd.s32 %v296, 128
        %v313 = vadd.s32 %v296, 136
        %v314 = vadd.s32 %v296, 144
        %v315 = vadd.s32 %v296, 152
        %v316 = vadd.s32 %v296, 160
        %v317 = vadd.s32 %v296, 168
        %v318 = vadd.s32 %v296, 176
        %v319 = vadd.s32 %v296, 184
        %v320 = vadd.s32 %v296, 192
        %v321 = vadd.s32 %v296, 200
        %v322 = vadd.s32 %v296, 208
        %v323 = vadd.s32 %v296, 216
        %v324 = vadd.s32 %v296, 224
        %v325 = vadd.s32 %v296, 232
        %v326 = vadd.s32 %v296, 240
        %v327 = vadd.s32 %v296, 248
        %v328 = vlaneseq
        %v329 = vshrl.u32 %v328, 7
        %v330 = vsub.s32 0, %v329
        %v331 = vrot.slane %v294, %v330
        %vm332 = vcmp.eq.s32.totalorder %v296, %v331
        %vm333 = vcmp.eq.s32.totalorder %v297, %v331
        %vm334 = vcmp.eq.s32.totalorder %v298, %v331
        %vm335 = vcmp.eq.s32.totalorder %v299, %v331
        %vm336 = vcmp.eq.s32.totalorder %v300, %v331
        %vm337 = vcmp.eq.s32.totalorder %v301, %v331
        %vm338 = vcmp.eq.s32.totalorder %v302, %v331
        %vm339 = vcmp.eq.s32.totalorder %v303, %v331
        %vm340 = vcmp.eq.s32.totalorder %v304, %v331
        %vm341 = vcmp.eq.s32.totalorder %v305, %v331
        %vm342 = vcmp.eq.s32.totalorder %v306, %v331
        %vm343 = vcmp.eq.s32.totalorder %v307, %v331
        %vm344 = vcmp.eq.s32.totalorder %v308, %v331
        %vm345 = vcmp.eq.s32.totalorder %v309, %v331
        %vm346 = vcmp.eq.s32.totalorder %v310, %v331
        %vm347 = vcmp.eq.s32.totalorder %v311, %v331
        %vm348 = vcmp.eq.s32.totalorder %v312, %v331
        %vm349 = vcmp.eq.s32.totalorder %v313, %v331
        %vm350 = vcmp.eq.s32.totalorder %v314, %v331
        %vm351 = vcmp.eq.s32.totalorder %v315, %v331
        %vm352 = vcmp.eq.s32.totalorder %v316, %v331
        %vm353 = vcmp.eq.s32.totalorder %v317, %v331
        %vm354 = vcmp.eq.s32.totalorder %v318, %v331
        %vm355 = vcmp.eq.s32.totalorder %v319, %v331
        %vm356 = vcmp.eq.s32.totalorder %v320, %v331
        %vm357 = vcmp.eq.s32.totalorder %v321, %v331
        %vm358 = vcmp.eq.s32.totalorder %v322, %v331
        %vm359 = vcmp.eq.s32.totalorder %v323, %v331
        %vm360 = vcmp.eq.s32.totalorder %v324, %v331
        %vm361 = vcmp.eq.s32.totalorder %v325, %v331
        %vm362 = vcmp.eq.s32.totalorder %v326, %v331
        %vm363 = vcmp.eq.s32.totalorder %v327, %v331
        %v364 = vsel %vm332, 1, 0
        %v365 = vsel %vm333, 1, 0
        %v366 = vsel %vm334, 1, 0
        %v367 = vsel %vm335, 1, 0
        %v368 = vsel %vm336, 1, 0
        %v369 = vsel %vm337, 1, 0
        %v370 = vsel %vm338, 1, 0
        %v371 = vsel %vm339, 1, 0
        %v372 = vsel %vm340, 1, 0
        %v373 = vsel %vm341, 1, 0
        %v374 = vsel %vm342, 1, 0
        %v375 = vsel %vm343, 1, 0
        %v376 = vsel %vm344, 1, 0
        %v377 = vsel %vm345, 1, 0
        %v378 = vsel %vm346, 1, 0
        %v379 = vsel %vm347, 1, 0
        %v380 = vsel %vm348, 1, 0
        %v381 = vsel %vm349, 1, 0
        %v382 = vsel %vm350, 1, 0
        %v383 = vsel %vm351, 1, 0
        %v384 = vsel %vm352, 1, 0
        %v385 = vsel %vm353, 1, 0
        %v386 = vsel %vm354, 1, 0
        %v387 = vsel %vm355, 1, 0
        %v388 = vsel %vm356, 1, 0
        %v389 = vsel %vm357, 1, 0
        %v390 = vsel %vm358, 1, 0
        %v391 = vsel %vm359, 1, 0
        %v392 = vsel %vm360, 1, 0
        %v393 = vsel %vm361, 1, 0
        %v394 = vsel %vm362, 1, 0
        %v395 = vsel %vm363, 1, 0
        %v396 = vcvt.s32.f32 %v364
        %v397 = vcvt.s32.f32 %v365
        %v398 = vcvt.s32.f32 %v366
        %v399 = vcvt.s32.f32 %v367
        %v400 = vcvt.s32.f32 %v368
        %v401 = vcvt.s32.f32 %v369
        %v402 = vcvt.s32.f32 %v370
        %v403 = vcvt.s32.f32 %v371
        %v404 = vcvt.s32.f32 %v372
        %v405 = vcvt.s32.f32 %v373
        %v406 = vcvt.s32.f32 %v374
        %v407 = vcvt.s32.f32 %v375
        %v408 = vcvt.s32.f32 %v376
        %v409 = vcvt.s32.f32 %v377
        %v410 = vcvt.s32.f32 %v378
        %v411 = vcvt.s32.f32 %v379
        %v412 = vcvt.s32.f32 %v380
        %v413 = vcvt.s32.f32 %v381
        %v414 = vcvt.s32.f32 %v382
        %v415 = vcvt.s32.f32 %v383
        %v416 = vcvt.s32.f32 %v384
        %v417 = vcvt.s32.f32 %v385
        %v418 = vcvt.s32.f32 %v386
        %v419 = vcvt.s32.f32 %v387
        %v420 = vcvt.s32.f32 %v388
        %v421 = vcvt.s32.f32 %v389
        %v422 = vcvt.s32.f32 %v390
        %v423 = vcvt.s32.f32 %v391
        %v424 = vcvt.s32.f32 %v392
        %v425 = vcvt.s32.f32 %v393
        %v426 = vcvt.s32.f32 %v394
        %v427 = vcvt.s32.f32 %v395
        %v428 = vld [vmem:[%s236] sm:$0xff]
        %v430 = vcombine.high %v428, %v428
        %432 = vmatprep.subr.mxu0 0.0
        %433 = vmatpush1.msra.mxu0 %v411
        %434 = vmatprep.subr.mxu0 0.0
        %435 = vmatpush1.msra.mxu0 %v410
        %436 = vmatprep.subr.mxu0 0.0
        %437 = vmatpush1.msra.mxu0 %v409
        %438 = vmatprep.subr.mxu0 0.0
        %439 = vmatpush1.msra.mxu0 %v408
        %440 = vmatprep.subr.mxu0 0.0
        %441 = vmatpush1.msra.mxu0 %v407
        %442 = vmatprep.subr.mxu0 0.0
        %443 = vmatpush1.msra.mxu0 %v406
        %444 = vmatprep.subr.mxu0 0.0
        %445 = vmatpush1.msra.mxu0 %v405
        %446 = vmatprep.subr.mxu0 0.0
        %447 = vmatpush1.msra.mxu0 %v404
        %448 = vmatprep.subr.mxu0 0.0
        %449 = vmatpush1.msra.mxu0 %v403
        %450 = vmatprep.subr.mxu0 0.0
        %451 = vmatpush1.msra.mxu0 %v402
        %452 = vmatprep.subr.mxu0 0.0
        %453 = vmatpush1.msra.mxu0 %v401
        %454 = vmatprep.subr.mxu0 0.0
        %455 = vmatpush1.msra.mxu0 %v400
        %456 = vmatprep.subr.mxu0 0.0
        %457 = vmatpush1.msra.mxu0 %v399
        %458 = vmatprep.subr.mxu0 0.0
        %459 = vmatpush1.msra.mxu0 %v398
        %460 = vmatprep.subr.mxu0 0.0
        %461 = vmatpush1.msra.mxu0 %v397
        %462 = vmatprep.subr.mxu0 0.0
        %463 = vmatpush1.msra.mxu0 %v396
        %464 = vmatprep.subr.mxu0 0.0
        %465 = vmatpush2.msra.mxu0 %v427
        %466 = vmatprep.subr.mxu0 0.0
        %467 = vmatpush2.msra.mxu0 %v426
        %468 = vmatprep.subr.mxu0 0.0
        %469 = vmatpush2.msra.mxu0 %v425
        %470 = vmatprep.subr.mxu0 0.0
        %471 = vmatpush2.msra.mxu0 %v424
        %472 = vmatprep.subr.mxu0 0.0
        %473 = vmatpush2.msra.mxu0 %v423
        %474 = vmatprep.subr.mxu0 0.0
        %475 = vmatpush2.msra.mxu0 %v422
        %476 = vmatprep.subr.mxu0 0.0
        %477 = vmatpush2.msra.mxu0 %v421
        %478 = vmatprep.subr.mxu0 0.0
        %479 = vmatpush2.msra.mxu0 %v420
        %480 = vmatprep.subr.mxu0 0.0
        %481 = vmatpush2.msra.mxu0 %v419
        %482 = vmatprep.subr.mxu0 0.0
        %483 = vmatpush2.msra.mxu0 %v418
        %484 = vmatprep.subr.mxu0 0.0
        %485 = vmatpush2.msra.mxu0 %v417
        %486 = vmatprep.subr.mxu0 0.0
        %487 = vmatpush2.msra.mxu0 %v416
        %488 = vmatprep.subr.mxu0 0.0
        %489 = vmatpush2.msra.mxu0 %v415
        %490 = vmatprep.subr.mxu0 0.0
        %491 = vmatpush2.msra.mxu0 %v414
        %492 = vmatprep.subr.mxu0 0.0
        %493 = vmatpush2.msra.mxu0 %v413
        %494 = vmatprep.subr.mxu0 0.0
        %495 = vmatpush2.msra.mxu0 %v412
        %496 = vmatprep.mubr.f32.mxu0 %v430
        %497 = vmatmul.mubr.f32.gmra.mxu0 %v428
        %v498 = vpop.f32.mrf.mxu0
        %v499 = vadd.f32 0.0, %v498
        %v500 = vpop.f32.mrf.mxu0
        %501 = vdwg.mxu0
        %v502 = vld [vmem:[%s253] sm:$0xf]
        %v503 = vld [vmem:[%s290] sm:$0x1]
        %v504 = vsub.f32 %v499, %v502
        %v505 = vand.u32 2147483647, %v504
        %v507 = vlaneseq
        %v508 = vshrl.u32 %v507, 7
        %v509 = vsub.s32 0, %v508
        %v510 = vrot.slane %v503, %v509
        %v512 = vmul.f32 %v505, %v510
        %vm513 = vcmask 60416
        %v514 = vsel %vm513, %v512, 0.0
        %515 = vadd.xlane.f32.xlu0 %v514
        %v516 = vpop.xlane.xlu0 %515
        %v517 = vrot.slane %v516, 4
        %v518 = vadd.f32 %v516, %v517
        %v519 = vrot.slane %v518, 2
        %v520 = vadd.f32 %v518, %v519
        %v521 = vrot.slane %v520, 1
        %v522 = vadd.f32 %v520, %v521
        %s523 = vtos %v522
        %v524 = vstv %s523
        %vm525 = vcmask 0
        %526 = vst.msk [vmem:[%s293] sm:$0x1] %vm525, %v524
        %p527 = scmp.lt.s32.totalorder %s21, 1
        %s528 = scalar_select %p527, %s21, 1
        %s529 = scalar_lea.vmem %s4, %s528
        // Predicated region
        $region49: #{tpu_custom_call.1} parent=35 // pred_check
          %p530 = pneg %p143
        $region50: #{tpu_custom_call.1} parent=35 // pred_check_branch
          %532 = sbr.rel (%p530) target = $region52
        $region51: #{tpu_custom_call.1} parent=35 // pred_region
          _
        $region52: #{tpu_custom_call.1} parent=35 // pred_fallthru
          _
      $region36: #{tpu_custom_call.1} parent=5 // pred_fallthru
        _
      %p533 = scmp.le.s32.totalorder 2, %s16
      // Predicated region
      $region53: #{tpu_custom_call.1} parent=5 // pred_check
        %p534 = pneg %p533
      $region54: #{tpu_custom_call.1} parent=5 // pred_check_branch
        %536 = sbr.rel (%p534) target = $region56
      $region55: #{tpu_custom_call.1} parent=5 // pred_region
        %s537 = ssub.s32 %s16, 2
        // Predicated region
        $region57: #{tpu_custom_call.1} parent=55 // pred_check
          %p538 = pneg %p149
        $region58: #{tpu_custom_call.1} parent=55 // pred_check_branch
          %540 = sbr.rel (%p538) target = $region60
        $region59: #{tpu_custom_call.1} parent=55 // pred_region
          %p541 = scmp.lt.s32.totalorder %s22, 1
          %s542 = scalar_select %p541, %s22, 1
          %s543 = scalar_lea.vmem %s4, %s542
        $region60: #{tpu_custom_call.1} parent=55 // pred_fallthru
          _
      $region56: #{tpu_custom_call.1} parent=5 // pred_fallthru
        _
    $region6: #{tpu_custom_call.1} parent=1 // loop_footer
      %s20 = sadd.s32 1, %s16
    $region7: #{tpu_custom_call.1} parent=1 // loop_footer_branch
      %15 = sbr.rel target = $region3
    $region8: #{tpu_custom_call.1} parent=1 // loop_exit
      _
    %544 = vsyncpa [#allocation3], 1
    %s545 = scalar_lea.sflag [#allocation3], 1
    %546 = vsyncpa %s545, 1
    %547 = vsyncpa [#allocation5], 1
    %s548 = scalar_lea.sflag [#allocation5], 1
    %549 = vsyncpa %s548, 1

</llo_original>
